<compile_context>
chip_gen: v7x
topology: tpu7x:2x2x1
jax: 0.10.0
libtpu: 0.0.40
codegen_flags: <defaults>
</compile_context>

<pallas_src>
import math

import jax
import jax.numpy as jnp
from jax import lax
from jax.experimental import pallas as pl
from jax.experimental.pallas import tpu as pltpu


_INV_SQRT2 = 1.0 / math.sqrt(2.0)


def ffn_kernel(x_ref, w1_ref, b1_ref, w2_ref, b2_ref, o_ref, acc_ref):
    """One (token-tile, hidden-tile) grid step of Linear -> GELU -> Linear."""
    h_idx = pl.program_id(1)

    @pl.when(h_idx == 0)
    def _():
        acc_ref[...] = jnp.zeros_like(acc_ref)

    # First linear, one hidden tile: (tm, dim) @ (dim, th) -> f32 (MXU).
    h = jnp.dot(x_ref[...], w1_ref[...], preferred_element_type=jnp.float32)
    h = h + b1_ref[...].astype(jnp.float32)

    # Exact (erf-based) GELU in f32 -- matches torch.nn.GELU() default.
    h = 0.5 * h * (1.0 + lax.erf(h * _INV_SQRT2))

    # Second linear: accumulate (tm, th) @ (th, dim) into the f32 scratch.
    acc_ref[...] += jnp.dot(h.astype(w2_ref.dtype), w2_ref[...],
                            preferred_element_type=jnp.float32)

    @pl.when(h_idx == pl.num_programs(1) - 1)
    def _():
        o_ref[...] = (acc_ref[...]
                      + b2_ref[...].astype(jnp.float32)).astype(o_ref.dtype)


def feed_forward(x, w1, b1, w2, b2, *, tm=128, th=512,
                 vmem_limit_bytes=48 * 1024 * 1024):
    """x: (..., dim) -> (..., dim).  Weights stored as (in, out): y = x @ W + b."""
    orig_shape = x.shape
    dim = orig_shape[-1]
    hidden = w1.shape[1]
    assert w1.shape == (dim, hidden)
    assert w2.shape == (hidden, dim)
    assert b1.shape == (hidden,)
    assert b2.shape == (dim,)

    M = 1
    for s in orig_shape[:-1]:
        M *= s
    x2d = x.reshape(M, dim)

    # --- tile sizing (tm multiple of 8, th multiple of 128 or full hidden) ---
    tm = max(8, ((int(tm) + 7) // 8) * 8)
    if th >= hidden:
        th = hidden
    else:
        th = max(128, ((int(th) + 127) // 128) * 128)

    M_pad = ((M + tm - 1) // tm) * tm
    H_pad = ((hidden + th - 1) // th) * th

    # --- padding (zero pad: padded W2 rows are zero -> zero contribution) ----
    if M_pad != M:
        x2d = jnp.pad(x2d, ((0, M_pad - M), (0, 0)))
    w1p = w1 if H_pad == hidden else jnp.pad(w1, ((0, 0), (0, H_pad - hidden)))
    b1p = (b1 if H_pad == hidden
           else jnp.pad(b1, (0, H_pad - hidden))).reshape(1, H_pad)
    w2p = w2 if H_pad == hidden else jnp.pad(w2, ((0, H_pad - hidden), (0, 0)))
    b2p = b2.reshape(1, dim)

    grid = (M_pad // tm, H_pad // th)

    # Advisory cost estimate so XLA can schedule neighbors around the kernel.
    itemsize = jnp.dtype(x.dtype).itemsize
    flops = 4 * M_pad * dim * H_pad                      # two matmuls
    bytes_accessed = itemsize * (2 * M_pad * dim         # x in + out
                                 + dim * H_pad + H_pad   # W1 + b1
                                 + H_pad * dim + dim)    # W2 + b2
    cost = pl.CostEstimate(flops=flops,
                           transcendentals=M_pad * H_pad,   # erf
                           bytes_accessed=bytes_accessed)

    out2d = pl.pallas_call(
        ffn_kernel,
        out_shape=jax.ShapeDtypeStruct((M_pad, dim), x.dtype),
        grid_spec=pltpu.PrefetchScalarGridSpec(
            num_scalar_prefetch=0,
            grid=grid,
            in_specs=[
                pl.BlockSpec((tm, dim), lambda i, h: (i, 0)),    # x tile
                pl.BlockSpec((dim, th), lambda i, h: (0, h)),    # W1 hidden tile
                pl.BlockSpec((1, th), lambda i, h: (0, h)),      # b1 hidden tile
                pl.BlockSpec((th, dim), lambda i, h: (h, 0)),    # W2 hidden tile
                pl.BlockSpec((1, dim), lambda i, h: (0, 0)),     # b2 (constant)
            ],
            out_specs=pl.BlockSpec((tm, dim), lambda i, h: (i, 0)),
            scratch_shapes=[pltpu.VMEM((tm, dim), jnp.float32)],  # f32 accumulator
        ),
        compiler_params=pltpu.CompilerParams(
            dimension_semantics=("parallel", "arbitrary"),
            vmem_limit_bytes=vmem_limit_bytes),
        cost_estimate=cost,
    )(x2d, w1p, b1p, w2p, b2p)

    if M_pad != M:
        out2d = out2d[:M]
    return out2d.reshape(orig_shape)


def init_params(key, dim, hidden_dim, dtype=jnp.float32):
    """Deterministic init mimicking nn.Linear's U(-1/sqrt(fan_in), +1/sqrt(fan_in))."""
    k1, k2, k3, k4 = jax.random.split(key, 4)
    bound1 = 1.0 / math.sqrt(dim)
    bound2 = 1.0 / math.sqrt(hidden_dim)
    # Stored as (in_features, out_features) so the kernel computes x @ W.
    w1 = jax.random.uniform(k1, (dim, hidden_dim), dtype, -bound1, bound1)
    b1 = jax.random.uniform(k2, (hidden_dim,), dtype, -bound1, bound1)
    w2 = jax.random.uniform(k3, (hidden_dim, dim), dtype, -bound2, bound2)
    b2 = jax.random.uniform(k4, (dim,), dtype, -bound2, bound2)
    return w1, b1, w2, b2


if __name__ == "__main__":
    # Small but lane-dense demo shapes (dim / hidden multiples of 128).
    batch, seq, dim, hidden_dim = 2, 8, 128, 256

    key = jax.random.PRNGKey(0)
    kx, kp = jax.random.split(key)
    x = jax.random.normal(kx, (batch, seq, dim), jnp.float32)
    w1, b1, w2, b2 = init_params(kp, dim, hidden_dim)

    # th=128 forces two hidden-axis steps so the accumulator path is exercised;
    # M=16 < tm=128 exercises the token-padding path.
    out = feed_forward(x, w1, b1, w2, b2, tm=128, th=128)
    out = jax.block_until_ready(out)

    # Reference in plain JAX (exact-erf GELU, highest-precision matmuls).
    hp = lax.Precision.HIGHEST
    h_ref = jnp.dot(x.reshape(-1, dim), w1, precision=hp) + b1
    h_ref = 0.5 * h_ref * (1.0 + lax.erf(h_ref / math.sqrt(2.0)))
    ref = (jnp.dot(h_ref, w2, precision=hp) + b2).reshape(batch, seq, dim)
    assert jnp.allclose(out, ref, atol=1e-4, rtol=1e-4), "mismatch vs reference"

    print("KERNEL_OK")
</pallas_src>

<mosaic_0001>
module attributes {stable_mosaic.version = 11 : i64} {
  func.func @ffn_kernel(%arg0: i32, %arg1: i32, %arg2: memref<128x128xf32, #tpu.memory_space<vmem>>, %arg3: memref<128x128xf32, #tpu.memory_space<vmem>>, %arg4: memref<1x128xf32, #tpu.memory_space<vmem>>, %arg5: memref<128x128xf32, #tpu.memory_space<vmem>>, %arg6: memref<1x128xf32, #tpu.memory_space<vmem>>, %arg7: memref<128x128xf32, #tpu.memory_space<vmem>>, %arg8: memref<128x128xf32, #tpu.memory_space<vmem>>) attributes {dimension_semantics = [#tpu.dimension_semantics<parallel>, #tpu.dimension_semantics<arbitrary>], iteration_bounds = array<i64: 1, 2>, scalar_prefetch = 0 : i64, scratch_operands = 1 : i64, tpu.core_type = #tpu.core_type<tc>, window_params = [{transform_indices = @transform_0, window_bounds = array<i64: 128, 128>}, {transform_indices = @transform_1, window_bounds = array<i64: 128, 128>}, {transform_indices = @transform_2, window_bounds = array<i64: 1, 128>}, {transform_indices = @transform_3, window_bounds = array<i64: 128, 128>}, {pipeline_mode = #tpu.pipeline_mode<synchronous>, transform_indices = @transform_4, window_bounds = array<i64: 1, 128>}, {transform_indices = @transform_5, window_bounds = array<i64: 128, 128>}]} {
    %c0_i32 = arith.constant 0 : i32
    %0 = arith.cmpi eq, %arg1, %c0_i32 : i32
    %1 = arith.extui %0 : i1 to i32
    %c0_i32_0 = arith.constant 0 : i32
    %2 = arith.cmpi ne, %1, %c0_i32_0 : i32
    scf.if %2 {
      %cst_17 = arith.constant 0.000000e+00 : f32
      %25 = vector.broadcast %cst_17 : f32 to vector<128x128xf32>
      %c0_18 = arith.constant 0 : index
      %c0_19 = arith.constant 0 : index
      %26 = vector.load %arg8[%c0_18, %c0_19] : memref<128x128xf32, #tpu.memory_space<vmem>>, vector<128x128xf32>
      tpu.vector_store %arg8[%c0_18, %c0_19], %25 {strides = array<i32>} : memref<128x128xf32, #tpu.memory_space<vmem>>, vector<128x128xf32>,
    } else {
    }
    %c0 = arith.constant 0 : index
    %c0_1 = arith.constant 0 : index
    %3 = vector.load %arg2[%c0, %c0_1] : memref<128x128xf32, #tpu.memory_space<vmem>>, vector<128x128xf32>
    %c0_2 = arith.constant 0 : index
    %c0_3 = arith.constant 0 : index
    %4 = vector.load %arg3[%c0_2, %c0_3] : memref<128x128xf32, #tpu.memory_space<vmem>>, vector<128x128xf32>
    %cst = arith.constant dense<0.000000e+00> : vector<128x128xf32>
    %5 = tpu.matmul %3, %4, %cst {dimension_numbers = #tpu.dot_dimension_numbers<[1], [0], [0], [1], [0, 0, 1, 1], [], []>} : vector<128x128xf32>, vector<128x128xf32>, vector<128x128xf32> -> vector<128x128xf32>
    %c0_4 = arith.constant 0 : index
    %c0_5 = arith.constant 0 : index
    %6 = vector.load %arg4[%c0_4, %c0_5] : memref<1x128xf32, #tpu.memory_space<vmem>>, vector<1x128xf32>
    %7 = vector.broadcast %6 : vector<1x128xf32> to vector<128x128xf32>
    %8 = arith.addf %5, %7 : vector<128x128xf32>
    %cst_6 = arith.constant 5.000000e-01 : f32
    %9 = vector.broadcast %cst_6 : f32 to vector<128x128xf32>
    %10 = arith.mulf %9, %8 : vector<128x128xf32>
    %cst_7 = arith.constant 0.707106769 : f32
    %11 = vector.broadcast %cst_7 : f32 to vector<128x128xf32>
    %12 = arith.mulf %8, %11 : vector<128x128xf32>
    %13 = math.erf %12 : vector<128x128xf32>
    %cst_8 = arith.constant 1.000000e+00 : f32
    %14 = vector.broadcast %cst_8 : f32 to vector<128x128xf32>
    %15 = arith.addf %14, %13 : vector<128x128xf32>
    %16 = arith.mulf %10, %15 : vector<128x128xf32>
    %c0_9 = arith.constant 0 : index
    %c0_10 = arith.constant 0 : index
    %17 = vector.load %arg8[%c0_9, %c0_10] : memref<128x128xf32, #tpu.memory_space<vmem>>, vector<128x128xf32>
    %c0_11 = arith.constant 0 : index
    %c0_12 = arith.constant 0 : index
    %18 = vector.load %arg5[%c0_11, %c0_12] : memref<128x128xf32, #tpu.memory_space<vmem>>, vector<128x128xf32>
    %cst_13 = arith.constant dense<0.000000e+00> : vector<128x128xf32>
    %19 = tpu.matmul %16, %18, %cst_13 {dimension_numbers = #tpu.dot_dimension_numbers<[1], [0], [0], [1], [0, 0, 1, 1], [], []>} : vector<128x128xf32>, vector<128x128xf32>, vector<128x128xf32> -> vector<128x128xf32>
    %20 = arith.addf %17, %19 : vector<128x128xf32>
    %c0_14 = arith.constant 0 : index
    %c0_15 = arith.constant 0 : index
    %21 = vector.load %arg8[%c0_14, %c0_15] : memref<128x128xf32, #tpu.memory_space<vmem>>, vector<128x128xf32>
    tpu.vector_store %arg8[%c0_14, %c0_15], %20 {strides = array<i32>} : memref<128x128xf32, #tpu.memory_space<vmem>>, vector<128x128xf32>,
    %c1_i32 = arith.constant 1 : i32
    %22 = arith.cmpi eq, %arg1, %c1_i32 : i32
    %23 = arith.extui %22 : i1 to i32
    %c0_i32_16 = arith.constant 0 : i32
    %24 = arith.cmpi ne, %23, %c0_i32_16 : i32
    scf.if %24 {
      %c0_17 = arith.constant 0 : index
      %c0_18 = arith.constant 0 : index
      %25 = vector.load %arg8[%c0_17, %c0_18] : memref<128x128xf32, #tpu.memory_space<vmem>>, vector<128x128xf32>
      %c0_19 = arith.constant 0 : index
      %c0_20 = arith.constant 0 : index
      %26 = vector.load %arg6[%c0_19, %c0_20] : memref<1x128xf32, #tpu.memory_space<vmem>>, vector<1x128xf32>
      %27 = vector.broadcast %26 : vector<1x128xf32> to vector<128x128xf32>
      %28 = arith.addf %25, %27 : vector<128x128xf32>
      %c0_21 = arith.constant 0 : index
      %c0_22 = arith.constant 0 : index
      %29 = vector.load %arg7[%c0_21, %c0_22] : memref<128x128xf32, #tpu.memory_space<vmem>>, vector<128x128xf32>
      tpu.vector_store %arg7[%c0_21, %c0_22], %28 {strides = array<i32>} : memref<128x128xf32, #tpu.memory_space<vmem>>, vector<128x128xf32>,
    } else {
    }
    return
  }
  func.func @transform_0(%arg0: i32, %arg1: i32) -> (i32, i32) {
    %c0_i32 = arith.constant 0 : i32
    %c0_i32_0 = arith.constant 0 : i32
    return %arg0, %c0_i32 : i32, i32
  }
  func.func @transform_1(%arg0: i32, %arg1: i32) -> (i32, i32) {
    %c0_i32 = arith.constant 0 : i32
    %c0_i32_0 = arith.constant 0 : i32
    return %c0_i32, %arg1 : i32, i32
  }
  func.func @transform_2(%arg0: i32, %arg1: i32) -> (i32, i32) {
    %c0_i32 = arith.constant 0 : i32
    %c0_i32_0 = arith.constant 0 : i32
    return %c0_i32, %arg1 : i32, i32
  }
  func.func @transform_3(%arg0: i32, %arg1: i32) -> (i32, i32) {
    %c0_i32 = arith.constant 0 : i32
    %c0_i32_0 = arith.constant 0 : i32
    return %arg1, %c0_i32 : i32, i32
  }
  func.func @transform_4(%arg0: i32, %arg1: i32) -> (i32, i32) {
    %c0_i32 = arith.constant 0 : i32
    %c0_i32_0 = arith.constant 0 : i32
    %c0_i32_1 = arith.constant 0 : i32
    return %c0_i32, %c0_i32_0 : i32, i32
  }
  func.func @transform_5(%arg0: i32, %arg1: i32) -> (i32, i32) {
    %c0_i32 = arith.constant 0 : i32
    %c0_i32_0 = arith.constant 0 : i32
    return %arg0, %c0_i32 : i32, i32
  }
}

</mosaic_0001>

<llo_original>
// kernel: tpu_custom_call.1
$region0: #{tpu_custom_call.1}
  #allocation0 [shape = 'u32[]', space=smem, size = 0x4, offset = 0x4, fixed_abs, tag = 'smem constant byte address 0x4 - core index']
  #allocation1 [shape = 'u32[144,128]{1,0:T(1,128)}', space=vmem, size = 0x12000, scoped, tag = 'internal scratch']
  #allocation2 [shape = 'f32[128,128]{1,0:T(8,128)}', space=vmem, size = 0x10000, scoped, tag = 'scratch operand']
  %s0 = inlined_call_operand.hbm [shape: f32[128,128], index: 0, kind: input, shape index: {}]
  %s1 = inlined_call_operand.hbm [shape: f32[128,256], index: 1, kind: input, shape index: {}]
  %s2 = inlined_call_operand.vmem [shape: f32[1,256], index: 2, kind: input, shape index: {}]
  %s3 = inlined_call_operand.hbm [shape: f32[256,128], index: 3, kind: input, shape index: {}]
  %s4 = inlined_call_operand.vmem [shape: f32[1,128], index: 4, kind: input, shape index: {}]
  %s5 = inlined_call_operand.hbm [shape: f32[128,128], index: 5, kind: output, shape index: {}]
  %s6 = sld [smem:[#allocation0]]
  $region73: #{tpu_custom_call.1} parent=0
    _
  %s8 = ssub.s32 1, %s6
  %s9 = scalar_select 0, %s8, %s6
  $region1: #{tpu_custom_call.1} parent=0
    #allocation3 [shape = 'u8[65536]{0}', space=vmem, size = 0x10000, scoped, tag = 'input window, operand 0, single buffered']
    #allocation4 [shape = 's32[2]{0}', space=sflag, size = 0x8, scoped, tag = 'scoped memory for tpu_custom_call.1']
    #allocation5 [shape = 's32[2]{0}', space=sflag, size = 0x8, scoped, tag = 'scoped memory for tpu_custom_call.1']
    #allocation6 [shape = 'u8[131072]{0}', space=vmem, size = 0x20000, scoped, tag = 'input window, operand 1']
    #allocation7 [shape = 's32[2]{0}', space=sflag, size = 0x8, scoped, tag = 'scoped memory for tpu_custom_call.1']
    #allocation8 [shape = 'u8[131072]{0}', space=vmem, size = 0x20000, scoped, tag = 'input window, operand 3']
    #allocation9 [shape = 'u8[65536]{0}', space=vmem, size = 0x10000, scoped, tag = 'output window, operand 0, single buffered']
    %10 = vsyncpa [#allocation4], 0
    %11 = vsyncpa [#allocation7], 0
    %s12 = scalar_lea.sflag [#allocation7], 1
    %13 = vsyncpa %s12, 0
    %14 = vsyncpa [#allocation5], 0
    loop: start=0, step=1, limit=4
    $region2: #{tpu_custom_call.1} parent=1 // loop_pre_header
      _
    $region3: #{tpu_custom_call.1} parent=1 // loop_header
      %s16 = sphi 0, %s20
      %p17 = scmp.ge.s32.totalorder %s16, 4
      %s23 = sphi 0, %s35
      %s24 = sphi 0, %s31
      %s25 = sphi 0, %s23
      %s26 = sphi 0, %s24
      %s27 = sphi 0, %s25
      %s28 = sphi 0, %s26
      %s38 = sphi 0, %s40
      %s41 = sphi 0, %s38
      %s42 = sphi 0, %s41
      %s58 = sphi 0, %s42
      %s64 = sphi 0, %s66
      %s67 = sphi 0, %s64
      %s68 = sphi 0, %s67
      %s84 = sphi 0, %s68
      %s90 = sphi 0, %s92
      %s93 = sphi 0, %s90
      %s94 = sphi 0, %s93
      %s110 = sphi 0, %s94
      %s116 = sphi 0, %s118
      %s119 = sphi 0, %s116
      %s120 = sphi 0, %s119
      %s136 = sphi 0, %s120
      %s140 = sphi 0, %s140
      %s142 = sphi 0, %s140
      %s143 = sphi 0, %s142
      %s157 = sphi 0, %s143
      %s163 = sphi 0, %s165
      %s166 = sphi 0, %s163
      %s167 = sphi 0, %s166
      %s183 = sphi 0, %s167
    $region4: #{tpu_custom_call.1} parent=1 // loop_header_branch
      %19 = sbr.rel (%p17) target = $region8
    $region5: #{tpu_custom_call.1} parent=1 // loop_body
      %s21 = ssub.s32 %s16, 1
      %s22 = ssub.s32 %s16, 2
      %s29 = sadd.s32 1, %s24
      %p30 = scmp.ge.s32.totalorder %s29, 2
      %s31 = scalar_select %p30, 0, %s29
      %s32 = sadd.s32 1, %s23
      %s33 = scalar_select %p30, %s32, %s23
      %p34 = scmp.ge.s32.totalorder %s33, 1
      %s35 = scalar_select %p34, 0, %s33
      %s36 = ssub.s32 %s23, %s35
      %p37 = scmp.eq.s32.totalorder %s36, 0
      %s39 = sadd.s32 %s38, 1
      %s40 = scalar_select %p37, %s38, %s39
      %p43 = pneg %p37
      %p44 = scmp.eq.s32.totalorder %s16, 1
      %p45 = por %p43, %p44
      %p46 = scmp.ne.s32.totalorder %s38, %s41
      %p47 = scmp.eq.s32.totalorder %s16, 0
      %p48 = por %p46, %p47
      %p49 = scmp.ne.s32.totalorder %s38, %s41
      %p50 = scmp.eq.s32.totalorder %s21, 1
      %p51 = por %p49, %p50
      %p52 = scmp.ne.s32.totalorder %s41, %s42
      %p53 = scmp.eq.s32.totalorder %s21, 0
      %p54 = por %p52, %p53
      %p55 = scmp.ne.s32.totalorder %s41, %s42
      %p56 = scmp.eq.s32.totalorder %s22, 1
      %p57 = por %p55, %p56
      %p59 = scmp.ne.s32.totalorder %s42, %s58
      %p60 = scmp.eq.s32.totalorder %s22, 0
      %p61 = por %p59, %p60
      %s62 = ssub.s32 %s24, %s31
      %p63 = scmp.eq.s32.totalorder %s62, 0
      %s65 = sadd.s32 %s64, 1
      %s66 = scalar_select %p63, %s64, %s65
      %p69 = pneg %p63
      %p70 = scmp.eq.s32.totalorder %s16, 1
      %p71 = por %p69, %p70
      %p72 = scmp.ne.s32.totalorder %s64, %s67
      %p73 = scmp.eq.s32.totalorder %s16, 0
      %p74 = por %p72, %p73
      %p75 = scmp.ne.s32.totalorder %s64, %s67
      %p76 = scmp.eq.s32.totalorder %s21, 1
      %p77 = por %p75, %p76
      %p78 = scmp.ne.s32.totalorder %s67, %s68
      %p79 = scmp.eq.s32.totalorder %s21, 0
      %p80 = por %p78, %p79
      %p81 = scmp.ne.s32.totalorder %s67, %s68
      %p82 = scmp.eq.s32.totalorder %s22, 1
      %p83 = por %p81, %p82
      %p85 = scmp.ne.s32.totalorder %s68, %s84
      %p86 = scmp.eq.s32.totalorder %s22, 0
      %p87 = por %p85, %p86
      %s88 = ssub.s32 %s24, %s31
      %p89 = scmp.eq.s32.totalorder %s88, 0
      %s91 = sadd.s32 %s90, 1
      %s92 = scalar_select %p89, %s90, %s91
      %p95 = pneg %p89
      %p96 = scmp.eq.s32.totalorder %s16, 1
      %p97 = por %p95, %p96
      %p98 = scmp.ne.s32.totalorder %s90, %s93
      %p99 = scmp.eq.s32.totalorder %s16, 0
      %p100 = por %p98, %p99
      %p101 = scmp.ne.s32.totalorder %s90, %s93
      %p102 = scmp.eq.s32.totalorder %s21, 1
      %p103 = por %p101, %p102
      %p104 = scmp.ne.s32.totalorder %s93, %s94
      %p105 = scmp.eq.s32.totalorder %s21, 0
      %p106 = por %p104, %p105
      %p107 = scmp.ne.s32.totalorder %s93, %s94
      %p108 = scmp.eq.s32.totalorder %s22, 1
      %p109 = por %p107, %p108
      %p111 = scmp.ne.s32.totalorder %s94, %s110
      %p112 = scmp.eq.s32.totalorder %s22, 0
      %p113 = por %p111, %p112
      %s114 = ssub.s32 %s24, %s31
      %p115 = scmp.eq.s32.totalorder %s114, 0
      %s117 = sadd.s32 %s116, 1
      %s118 = scalar_select %p115, %s116, %s117
      %p121 = pneg %p115
      %p122 = scmp.eq.s32.totalorder %s16, 1
      %p123 = por %p121, %p122
      %p124 = scmp.ne.s32.totalorder %s116, %s119
      %p125 = scmp.eq.s32.totalorder %s16, 0
      %p126 = por %p124, %p125
      %p127 = scmp.ne.s32.totalorder %s116, %s119
      %p128 = scmp.eq.s32.totalorder %s21, 1
      %p129 = por %p127, %p128
      %p130 = scmp.ne.s32.totalorder %s119, %s120
      %p131 = scmp.eq.s32.totalorder %s21, 0
      %p132 = por %p130, %p131
      %p133 = scmp.ne.s32.totalorder %s119, %s120
      %p134 = scmp.eq.s32.totalorder %s22, 1
      %p135 = por %p133, %p134
      %p137 = scmp.ne.s32.totalorder %s120, %s136
      %p138 = scmp.eq.s32.totalorder %s22, 0
      %p139 = por %p137, %p138
      %s141 = sadd.s32 %s140, 1
      %p144 = scmp.eq.s32.totalorder %s16, 1
      %p145 = scmp.ne.s32.totalorder %s140, %s142
      %p146 = scmp.eq.s32.totalorder %s16, 0
      %p147 = por %p145, %p146
      %p148 = scmp.ne.s32.totalorder %s140, %s142
      %p149 = scmp.eq.s32.totalorder %s21, 1
      %p150 = por %p148, %p149
      %p151 = scmp.ne.s32.totalorder %s142, %s143
      %p152 = scmp.eq.s32.totalorder %s21, 0
      %p153 = por %p151, %p152
      %p154 = scmp.ne.s32.totalorder %s142, %s143
      %p155 = scmp.eq.s32.totalorder %s22, 1
      %p156 = por %p154, %p155
      %p158 = scmp.ne.s32.totalorder %s143, %s157
      %p159 = scmp.eq.s32.totalorder %s22, 0
      %p160 = por %p158, %p159
      %s161 = ssub.s32 %s23, %s35
      %p162 = scmp.eq.s32.totalorder %s161, 0
      %s164 = sadd.s32 %s163, 1
      %s165 = scalar_select %p162, %s163, %s164
      %p168 = pneg %p162
      %p169 = scmp.eq.s32.totalorder %s16, 1
      %p170 = por %p168, %p169
      %p171 = scmp.ne.s32.totalorder %s163, %s166
      %p172 = scmp.eq.s32.totalorder %s16, 0
      %p173 = por %p171, %p172
      %p174 = scmp.ne.s32.totalorder %s163, %s166
      %p175 = scmp.eq.s32.totalorder %s21, 1
      %p176 = por %p174, %p175
      %p177 = scmp.ne.s32.totalorder %s166, %s167
      %p178 = scmp.eq.s32.totalorder %s21, 0
      %p179 = por %p177, %p178
      %p180 = scmp.ne.s32.totalorder %s166, %s167
      %p181 = scmp.eq.s32.totalorder %s22, 1
      %p182 = por %p180, %p181
      %p184 = scmp.ne.s32.totalorder %s167, %s183
      %p185 = scmp.eq.s32.totalorder %s22, 0
      %p186 = por %p184, %p185
      %p187 = scmp.le.s32.totalorder 1, %s16
      %p188 = scmp.lt.s32.totalorder %s16, 3
      %p189 = pnand %p187, %p188
      %p190 = pneg %p189
      // Predicated region
      $region9: #{tpu_custom_call.1} parent=5 // pred_check
        _
      $region10: #{tpu_custom_call.1} parent=5 // pred_check_branch
        %192 = sbr.rel (%p189) target = $region12
      $region11: #{tpu_custom_call.1} parent=5 // pred_region
        %s193 = ssub.s32 %s16, 1
        // Predicated region
        $region13: #{tpu_custom_call.1} parent=11 // pred_check
          %p194 = pneg %p54
        $region14: #{tpu_custom_call.1} parent=11 // pred_check_branch
          %196 = sbr.rel (%p194) target = $region16
        $region15: #{tpu_custom_call.1} parent=11 // pred_region
          %s197 = smul.u32 16, %s25
          %s199 = ssub.s32 2048, 2048
          %200 = vsyncadd [#allocation4], %s199
          %s201 = smul.addr %s197, 128
          %s202 = scalar_lea.hbm %s0, %s201
          %s203 = sshll.u32 [#allocation3], 4
          %s204 = int_to_ptr.vmem [resolvable:$true] %s203
          %209 = dma.hbm_to_vmem [thread:$0]  %s202, 2048, %s204, [#allocation4], 128, 128, 8
        $region16: #{tpu_custom_call.1} parent=11 // pred_fallthru
          _
        // Predicated region
        $region17: #{tpu_custom_call.1} parent=11 // pred_check
          %p210 = pneg %p153
        $region18: #{tpu_custom_call.1} parent=11 // pred_check_branch
          %212 = sbr.rel (%p210) target = $region20
        $region19: #{tpu_custom_call.1} parent=11 // pred_region
          _
        $region20: #{tpu_custom_call.1} parent=11 // pred_fallthru
          _
      $region12: #{tpu_custom_call.1} parent=5 // pred_fallthru
        _
      %p213 = scmp.lt.s32.totalorder %s16, 2
      // Predicated region
      $region21: #{tpu_custom_call.1} parent=5 // pred_check
        %p214 = pneg %p213
      $region22: #{tpu_custom_call.1} parent=5 // pred_check_branch
        %216 = sbr.rel (%p214) target = $region24
      $region23: #{tpu_custom_call.1} parent=5 // pred_region
        // Predicated region
        $region25: #{tpu_custom_call.1} parent=23 // pred_check
          %p217 = pneg %p74
        $region26: #{tpu_custom_call.1} parent=23 // pred_check_branch
          %219 = sbr.rel (%p217) target = $region28
        $region27: #{tpu_custom_call.1} parent=23 // pred_region
          %s220 = sand.u32 %s16, 1
          %s221 = scalar_lea.sflag [#allocation7], %s220
          %s222 = sand.u32 %s64, 1
          %s223 = smul.addr %s222, 128
          %s224 = scalar_lea.vmem [#allocation6], %s223
          %s226 = ssub.s32 2048, 2048
          %227 = vsyncadd %s221, %s226
          %s228 = smul.addr %s24, 128
          %s229 = scalar_lea.hbm %s1, %s228
          %s230 = sshll.u32 %s224, 4
          %s231 = int_to_ptr.vmem [resolvable:$true] %s230
          %236 = dma.hbm_to_vmem [thread:$0]  %s229, 2048, %s231, %s221, 256, 128, 8
        $region28: #{tpu_custom_call.1} parent=23 // pred_fallthru
          _
        // Predicated region
        $region29: #{tpu_custom_call.1} parent=23 // pred_check
          %p237 = pneg %p100
        $region30: #{tpu_custom_call.1} parent=23 // pred_check_branch
          %239 = sbr.rel (%p237) target = $region32
        $region31: #{tpu_custom_call.1} parent=23 // pred_region
          %p240 = scmp.lt.s32.totalorder %s24, 1
          %s241 = scalar_select %p240, %s24, 1
          %s242 = scalar_lea.vmem %s2, %s241
        $region32: #{tpu_custom_call.1} parent=23 // pred_fallthru
          _
        // Predicated region
        $region33: #{tpu_custom_call.1} parent=23 // pred_check
          %p243 = pneg %p126
        $region34: #{tpu_custom_call.1} parent=23 // pred_check_branch
          %245 = sbr.rel (%p243) target = $region36
        $region35: #{tpu_custom_call.1} parent=23 // pred_region
          %s246 = sand.u32 %s16, 1
          %s247 = scalar_lea.sflag [#allocation7], %s246
          %s248 = sand.u32 %s116, 1
          %s249 = smul.addr %s248, 128
          %s250 = scalar_lea.vmem [#allocation8], %s249
          %s251 = smul.u32 16, %s24
          %s253 = ssub.s32 2048, 2048
          %254 = vsyncadd %s247, %s253
          %s255 = smul.addr %s251, 128
          %s256 = scalar_lea.hbm %s3, %s255
          %s257 = sshll.u32 %s250, 4
          %s258 = int_to_ptr.vmem [resolvable:$true] %s257
          %263 = dma.hbm_to_vmem [thread:$0]  %s256, 2048, %s258, %s247, 128, 128, 8
        $region36: #{tpu_custom_call.1} parent=23 // pred_fallthru
          _
      $region24: #{tpu_custom_call.1} parent=5 // pred_fallthru
        _
      %p264 = scmp.le.s32.totalorder 1, %s16
      %p265 = scmp.lt.s32.totalorder %s16, 3
      %p266 = pnand %p264, %p265
      %p267 = pneg %p266
      // Predicated region
      $region37: #{tpu_custom_call.1} parent=5 // pred_check
        _
      $region38: #{tpu_custom_call.1} parent=5 // pred_check_branch
        %269 = sbr.rel (%p266) target = $region40
      $region39: #{tpu_custom_call.1} parent=5 // pred_region
        %s270 = ssub.s32 %s16, 1
        // Predicated region
        $region41: #{tpu_custom_call.1} parent=39 // pred_check
          %p271 = pneg %p54
        $region42: #{tpu_custom_call.1} parent=39 // pred_check_branch
          %273 = sbr.rel (%p271) target = $region44
        $region43: #{tpu_custom_call.1} parent=39 // pred_region
          %274 = dma.done [#allocation4], 2048
        $region44: #{tpu_custom_call.1} parent=39 // pred_fallthru
          _
        %s275 = sand.u32 %s21, 1
        %s276 = scalar_lea.sflag [#allocation7], %s275
        %s277 = sand.u32 %s67, 1
        %s278 = smul.addr %s277, 128
        %s279 = scalar_lea.vmem [#allocation6], %s278
        // Predicated region
        $region45: #{tpu_custom_call.1} parent=39 // pred_check
          %p280 = pneg %p80
        $region46: #{tpu_custom_call.1} parent=39 // pred_check_branch
          %282 = sbr.rel (%p280) target = $region48
        $region47: #{tpu_custom_call.1} parent=39 // pred_region
          %283 = dma.done %s276, 2048
        $region48: #{tpu_custom_call.1} parent=39 // pred_fallthru
          _
        %s284 = sand.u32 %s21, 1
        %s285 = scalar_lea.sflag [#allocation7], %s284
        %s286 = sand.u32 %s119, 1
        %s287 = smul.addr %s286, 128
        %s288 = scalar_lea.vmem [#allocation8], %s287
        // Predicated region
        $region49: #{tpu_custom_call.1} parent=39 // pred_check
          %p289 = pneg %p132
        $region50: #{tpu_custom_call.1} parent=39 // pred_check_branch
          %291 = sbr.rel (%p289) target = $region52
        $region51: #{tpu_custom_call.1} parent=39 // pred_region
          %292 = dma.done %s285, 2048
        $region52: #{tpu_custom_call.1} parent=39 // pred_fallthru
          _
        %p293 = pneg %p54
        %p294 = pneg %p51
        %s295 = sand.u32 %s21, 1
        %s296 = scalar_lea.sflag [#allocation7], %s295
        %s297 = sand.u32 %s67, 1
        %s298 = smul.addr %s297, 128
        %s299 = scalar_lea.vmem [#allocation6], %s298
        %p300 = pneg %p80
        %p301 = pneg %p77
        %p302 = scmp.lt.s32.totalorder %s26, 1
        %s303 = scalar_select %p302, %s26, 1
        %s304 = scalar_lea.vmem %s2, %s303
        %p305 = pneg %p106
        %p306 = pneg %p103
        %s307 = sand.u32 %s21, 1
        %s308 = scalar_lea.sflag [#allocation7], %s307
        %s309 = sand.u32 %s119, 1
        %s310 = smul.addr %s309, 128
        %s311 = scalar_lea.vmem [#allocation8], %s310
        %p312 = pneg %p132
        %p313 = pneg %p129
        %p314 = pneg %p153
        %p315 = pneg %p150
        %p316 = pneg %p179
        %p317 = pneg %p176
        %s318 = smul.u32 16, %s25
        %p319 = scmp.lt.s32.totalorder %s26, 1
        %s320 = scalar_select %p319, %s26, 1
        %s321 = scalar_lea.vmem %s2, %s320
        %s322 = smul.u32 16, %s26
        %s323 = smul.u32 16, %s25
        %p324 = scmp.eq.s32.totalorder %s26, 0
        // Predicated region
        $region53: #{tpu_custom_call.1} parent=39 // pred_check
          %p325 = pneg %p324
        $region54: #{tpu_custom_call.1} parent=39 // pred_check_branch
          %327 = sbr.rel (%p325) target = $region56
        $region55: #{tpu_custom_call.1} parent=39 // pred_region
          %328 = vst [vmem:[#allocation2] sm:$0xff] 0.0
          %329 = vst [vmem:[#allocation2 + $0x8] sm:$0xff] 0.0
          %330 = vst [vmem:[#allocation2 + $0x10] sm:$0xff] 0.0
          %331 = vst [vmem:[#allocation2 + $0x18] sm:$0xff] 0.0
          %332 = vst [vmem:[#allocation2 + $0x20] sm:$0xff] 0.0
          %333 = vst [vmem:[#allocation2 + $0x28] sm:$0xff] 0.0
          %334 = vst [vmem:[#allocation2 + $0x30] sm:$0xff] 0.0
          %335 = vst [vmem:[#allocation2 + $0x38] sm:$0xff] 0.0
          %336 = vst [vmem:[#allocation2 + $0x40] sm:$0xff] 0.0
          %337 = vst [vmem:[#allocation2 + $0x48] sm:$0xff] 0.0
          %338 = vst [vmem:[#allocation2 + $0x50] sm:$0xff] 0.0
          %339 = vst [vmem:[#allocation2 + $0x58] sm:$0xff] 0.0
          %340 = vst [vmem:[#allocation2 + $0x60] sm:$0xff] 0.0
          %341 = vst [vmem:[#allocation2 + $0x68] sm:$0xff] 0.0
          %342 = vst [vmem:[#allocation2 + $0x70] sm:$0xff] 0.0
          %343 = vst [vmem:[#allocation2 + $0x78] sm:$0xff] 0.0
        $region56: #{tpu_custom_call.1} parent=39 // pred_fallthru
          _
        %v344 = vld [vmem:[#allocation3] sm:$0xff]
        %v345 = vld [vmem:[#allocation3 + $0x8] sm:$0xff]
        %v346 = vld [vmem:[#allocation3 + $0x10] sm:$0xff]
        %v347 = vld [vmem:[#allocation3 + $0x18] sm:$0xff]
        %v348 = vld [vmem:[#allocation3 + $0x20] sm:$0xff]
        %v349 = vld [vmem:[#allocation3 + $0x28] sm:$0xff]
        %v350 = vld [vmem:[#allocation3 + $0x30] sm:$0xff]
        %v351 = vld [vmem:[#allocation3 + $0x38] sm:$0xff]
        %v352 = vld [vmem:[#allocation3 + $0x40] sm:$0xff]
        %v353 = vld [vmem:[#allocation3 + $0x48] sm:$0xff]
        %v354 = vld [vmem:[#allocation3 + $0x50] sm:$0xff]
        %v355 = vld [vmem:[#allocation3 + $0x58] sm:$0xff]
        %v356 = vld [vmem:[#allocation3 + $0x60] sm:$0xff]
        %v357 = vld [vmem:[#allocation3 + $0x68] sm:$0xff]
        %v358 = vld [vmem:[#allocation3 + $0x70] sm:$0xff]
        %v359 = vld [vmem:[#allocation3 + $0x78] sm:$0xff]
        %v360 = vld [vmem:[%s279] sm:$0xff]
        %v361 = vld [vmem:[%s279 + $0x8] sm:$0xff]
        %v362 = vld [vmem:[%s279 + $0x10] sm:$0xff]
        %v363 = vld [vmem:[%s279 + $0x18] sm:$0xff]
        %v364 = vld [vmem:[%s279 + $0x20] sm:$0xff]
        %v365 = vld [vmem:[%s279 + $0x28] sm:$0xff]
        %v366 = vld [vmem:[%s279 + $0x30] sm:$0xff]
        %v367 = vld [vmem:[%s279 + $0x38] sm:$0xff]
        %v368 = vld [vmem:[%s279 + $0x40] sm:$0xff]
        %v369 = vld [vmem:[%s279 + $0x48] sm:$0xff]
        %v370 = vld [vmem:[%s279 + $0x50] sm:$0xff]
        %v371 = vld [vmem:[%s279 + $0x58] sm:$0xff]
        %v372 = vld [vmem:[%s279 + $0x60] sm:$0xff]
        %v373 = vld [vmem:[%s279 + $0x68] sm:$0xff]
        %v374 = vld [vmem:[%s279 + $0x70] sm:$0xff]
        %v375 = vld [vmem:[%s279 + $0x78] sm:$0xff]
        %v376 = vld [vmem:[%s321] sm:$0x1]
        %v378 = vlaneseq
        %v379 = vshrl.u32 %v378, 7
        %v380 = vsub.s32 0, %v379
        %v381 = vrot.slane %v376, %v380
        %383 = vmatprep.subr.mxu0 0.0
        %384 = vmatpush1.msra.mxu0 %v360
        %385 = vmatprep.subr.mxu0 0.0
        %386 = vmatpush1.msra.mxu0 %v361
        %387 = vmatprep.subr.mxu0 0.0
        %388 = vmatpush1.msra.mxu0 %v362
        %389 = vmatprep.subr.mxu0 0.0
        %390 = vmatpush1.msra.mxu0 %v363
        %391 = vmatprep.subr.mxu0 0.0
        %392 = vmatpush1.msra.mxu0 %v364
        %393 = vmatprep.subr.mxu0 0.0
        %394 = vmatpush1.msra.mxu0 %v365
        %395 = vmatprep.subr.mxu0 0.0
        %396 = vmatpush1.msra.mxu0 %v366
        %397 = vmatprep.subr.mxu0 0.0
        %398 = vmatpush1.msra.mxu0 %v367
        %399 = vmatprep.subr.mxu0 0.0
        %400 = vmatpush1.msra.mxu0 %v368
        %401 = vmatprep.subr.mxu0 0.0
        %402 = vmatpush1.msra.mxu0 %v369
        %403 = vmatprep.subr.mxu0 0.0
        %404 = vmatpush1.msra.mxu0 %v370
        %405 = vmatprep.subr.mxu0 0.0
        %406 = vmatpush1.msra.mxu0 %v371
        %407 = vmatprep.subr.mxu0 0.0
        %408 = vmatpush1.msra.mxu0 %v372
        %409 = vmatprep.subr.mxu0 0.0
        %410 = vmatpush1.msra.mxu0 %v373
        %411 = vmatprep.subr.mxu0 0.0
        %412 = vmatpush1.msra.mxu0 %v374
        %413 = vmatprep.subr.mxu0 0.0
        %414 = vmatpush1.msra.mxu0 %v375
        %415 = vmatprep.subr.mxu0 0.0
        %416 = vmatpush1.msra.mxu0 0.0
        %417 = vmatprep.subr.mxu0 0.0
        %418 = vmatpush1.msra.mxu0 0.0
        %419 = vmatprep.subr.mxu0 0.0
        %420 = vmatpush1.msra.mxu0 0.0
        %421 = vmatprep.subr.mxu0 0.0
        %422 = vmatpush1.msra.mxu0 0.0
        %423 = vmatprep.subr.mxu0 0.0
        %424 = vmatpush1.msra.mxu0 0.0
        %425 = vmatprep.subr.mxu0 0.0
        %426 = vmatpush1.msra.mxu0 0.0
        %427 = vmatprep.subr.mxu0 0.0
        %428 = vmatpush1.msra.mxu0 0.0
        %429 = vmatprep.subr.mxu0 0.0
        %430 = vmatpush1.msra.mxu0 0.0
        %431 = vmatprep.subr.mxu0 0.0
        %432 = vmatpush1.msra.mxu0 0.0
        %433 = vmatprep.subr.mxu0 0.0
        %434 = vmatpush1.msra.mxu0 0.0
        %435 = vmatprep.subr.mxu0 0.0
        %436 = vmatpush1.msra.mxu0 0.0
        %437 = vmatprep.subr.mxu0 0.0
        %438 = vmatpush1.msra.mxu0 0.0
        %439 = vmatprep.subr.mxu0 0.0
        %440 = vmatpush1.msra.mxu0 0.0
        %441 = vmatprep.subr.mxu0 0.0
        %442 = vmatpush1.msra.mxu0 0.0
        %443 = vmatprep.subr.mxu0 0.0
        %444 = vmatpush1.msra.mxu0 0.0
        %445 = vmatprep.subr.mxu0 0.0
        %446 = vmatpush1.msra.mxu0 0.0
        %447 = vmatprep.mubr.f32.mxu0 0.0
        %448 = vmatmul.mubr.f32.gmra.mrb[0].mxu0 %v344
        %v449 = vpop.f32.mrb[0].mxu0
        %v450 = vadd.f32 %v381, %v449
        %v451 = vpop.f32.mrb[0].mxu0
        %452 = vmatprep.mubr.f32.mxu0 0.0
        %453 = vmatmul.mubr.f32.gmra.mrb[0].mxu0 %v345
        %v454 = vpop.f32.mrb[0].mxu0
        %v455 = vadd.f32 %v381, %v454
        %v456 = vpop.f32.mrb[0].mxu0
        %457 = vmatprep.mubr.f32.mxu0 0.0
        %458 = vmatmul.mubr.f32.gmra.mrb[0].mxu0 %v346
        %v459 = vpop.f32.mrb[0].mxu0
        %v460 = vadd.f32 %v381, %v459
        %v461 = vpop.f32.mrb[0].mxu0
        %462 = vmatprep.mubr.f32.mxu0 0.0
        %463 = vmatmul.mubr.f32.gmra.mrb[0].mxu0 %v347
        %v464 = vpop.f32.mrb[0].mxu0
        %v465 = vadd.f32 %v381, %v464
        %v466 = vpop.f32.mrb[0].mxu0
        %467 = vmatprep.mubr.f32.mxu0 0.0
        %468 = vmatmul.mubr.f32.gmra.mrb[0].mxu0 %v348
        %v469 = vpop.f32.mrb[0].mxu0
        %v470 = vadd.f32 %v381, %v469
        %v471 = vpop.f32.mrb[0].mxu0
        %472 = vmatprep.mubr.f32.mxu0 0.0
        %473 = vmatmul.mubr.f32.gmra.mrb[0].mxu0 %v349
        %v474 = vpop.f32.mrb[0].mxu0
        %v475 = vadd.f32 %v381, %v474
        %v476 = vpop.f32.mrb[0].mxu0
        %477 = vmatprep.mubr.f32.mxu0 0.0
        %478 = vmatmul.mubr.f32.gmra.mrb[0].mxu0 %v350
        %v479 = vpop.f32.mrb[0].mxu0
        %v480 = vadd.f32 %v381, %v479
        %v481 = vpop.f32.mrb[0].mxu0
        %482 = vmatprep.mubr.f32.mxu0 0.0
        %483 = vmatmul.mubr.f32.gmra.mrb[0].mxu0 %v351
        %v484 = vpop.f32.mrb[0].mxu0
        %v485 = vadd.f32 %v381, %v484
        %v486 = vpop.f32.mrb[0].mxu0
        %487 = vmatprep.mubr.f32.mxu0 0.0
        %488 = vmatmul.mubr.f32.gmra.mrb[0].mxu0 %v352
        %v489 = vpop.f32.mrb[0].mxu0
        %v490 = vadd.f32 %v381, %v489
        %v491 = vpop.f32.mrb[0].mxu0
        %492 = vmatprep.mubr.f32.mxu0 0.0
        %493 = vmatmul.mubr.f32.gmra.mrb[0].mxu0 %v353
        %v494 = vpop.f32.mrb[0].mxu0
        %v495 = vadd.f32 %v381, %v494
        %v496 = vpop.f32.mrb[0].mxu0
        %497 = vmatprep.mubr.f32.mxu0 0.0
        %498 = vmatmul.mubr.f32.gmra.mrb[0].mxu0 %v354
        %v499 = vpop.f32.mrb[0].mxu0
        %v500 = vadd.f32 %v381, %v499
        %v501 = vpop.f32.mrb[0].mxu0
        %502 = vmatprep.mubr.f32.mxu0 0.0
        %503 = vmatmul.mubr.f32.gmra.mrb[0].mxu0 %v355
        %v504 = vpop.f32.mrb[0].mxu0
        %v505 = vadd.f32 %v381, %v504
        %v506 = vpop.f32.mrb[0].mxu0
        %507 = vmatprep.mubr.f32.mxu0 0.0
        %508 = vmatmul.mubr.f32.gmra.mrb[0].mxu0 %v356
        %v509 = vpop.f32.mrb[0].mxu0
        %v510 = vadd.f32 %v381, %v509
        %v511 = vpop.f32.mrb[0].mxu0
        %512 = vmatprep.mubr.f32.mxu0 0.0
        %513 = vmatmul.mubr.f32.gmra.mrb[0].mxu0 %v357
        %v514 = vpop.f32.mrb[0].mxu0
        %v515 = vadd.f32 %v381, %v514
        %v516 = vpop.f32.mrb[0].mxu0
        %517 = vmatprep.mubr.f32.mxu0 0.0
        %518 = vmatmul.mubr.f32.gmra.mrb[0].mxu0 %v358
        %v519 = vpop.f32.mrb[0].mxu0
        %v520 = vadd.f32 %v381, %v519
        %v521 = vpop.f32.mrb[0].mxu0
        %522 = vmatprep.mubr.f32.mxu0 0.0
        %523 = vmatmul.mubr.f32.gmra.mrb[0].mxu0 %v359
        %v524 = vpop.f32.mrb[0].mxu0
        %v525 = vadd.f32 %v381, %v524
        %v526 = vpop.f32.mrb[0].mxu0
        %527 = vdwg.mxu0
        %v528 = vmul.f32 %v450, 0.5
        %v529 = vmul.f32 %v455, 0.5
        %v530 = vmul.f32 %v460, 0.5
        %v531 = vmul.f32 %v465, 0.5
        %v532 = vmul.f32 %v470, 0.5
        %v533 = vmul.f32 %v475, 0.5
        %v534 = vmul.f32 %v480, 0.5
        %v535 = vmul.f32 %v485, 0.5
        %v536 = vmul.f32 %v490, 0.5
        %v537 = vmul.f32 %v495, 0.5
        %v538 = vmul.f32 %v500, 0.5
        %v539 = vmul.f32 %v505, 0.5
        %v540 = vmul.f32 %v510, 0.5
        %v541 = vmul.f32 %v515, 0.5
        %v542 = vmul.f32 %v520, 0.5
        %v543 = vmul.f32 %v525, 0.5
        %v544 = vmul.f32 %v450, 0.70710677
        %v545 = vmul.f32 %v455, 0.70710677
        %v546 = vmul.f32 %v460, 0.70710677
        %v547 = vmul.f32 %v465, 0.70710677
        %v548 = vmul.f32 %v470, 0.70710677
        %v549 = vmul.f32 %v475, 0.70710677
        %v550 = vmul.f32 %v480, 0.70710677
        %v551 = vmul.f32 %v485, 0.70710677
        %v552 = vmul.f32 %v490, 0.70710677
        %v553 = vmul.f32 %v495, 0.70710677
        %v554 = vmul.f32 %v500, 0.70710677
        %v555 = vmul.f32 %v505, 0.70710677
        %v556 = vmul.f32 %v510, 0.70710677
        %v557 = vmul.f32 %v515, 0.70710677
        %v558 = vmul.f32 %v520, 0.70710677
        %v559 = vmul.f32 %v525, 0.70710677
        %v560 = verf.f32.pop %v544
        %v561 = verf.f32.pop %v545
        %v562 = verf.f32.pop %v546
        %v563 = verf.f32.pop %v547
        %v564 = verf.f32.pop %v548
        %v565 = verf.f32.pop %v549
        %v566 = verf.f32.pop %v550
        %v567 = verf.f32.pop %v551
        %v568 = verf.f32.pop %v552
        %v569 = verf.f32.pop %v553
        %v570 = verf.f32.pop %v554
        %v571 = verf.f32.pop %v555
        %v572 = verf.f32.pop %v556
        %v573 = verf.f32.pop %v557
        %v574 = verf.f32.pop %v558
        %v575 = verf.f32.pop %v559
        %v576 = vadd.f32 %v560, 1.0
        %v577 = vadd.f32 %v561, 1.0
        %v578 = vadd.f32 %v562, 1.0
        %v579 = vadd.f32 %v563, 1.0
        %v580 = vadd.f32 %v564, 1.0
        %v581 = vadd.f32 %v565, 1.0
        %v582 = vadd.f32 %v566, 1.0
        %v583 = vadd.f32 %v567, 1.0
        %v584 = vadd.f32 %v568, 1.0
        %v585 = vadd.f32 %v569, 1.0
        %v586 = vadd.f32 %v570, 1.0
        %v587 = vadd.f32 %v571, 1.0
        %v588 = vadd.f32 %v572, 1.0
        %v589 = vadd.f32 %v573, 1.0
        %v590 = vadd.f32 %v574, 1.0
        %v591 = vadd.f32 %v575, 1.0
        %v592 = vmul.f32 %v528, %v576
        %v593 = vmul.f32 %v529, %v577
        %v594 = vmul.f32 %v530, %v578
        %v595 = vmul.f32 %v531, %v579
        %v596 = vmul.f32 %v532, %v580
        %v597 = vmul.f32 %v533, %v581
        %v598 = vmul.f32 %v534, %v582
        %v599 = vmul.f32 %v535, %v583
        %v600 = vmul.f32 %v536, %v584
        %v601 = vmul.f32 %v537, %v585
        %v602 = vmul.f32 %v538, %v586
        %v603 = vmul.f32 %v539, %v587
        %v604 = vmul.f32 %v540, %v588
        %v605 = vmul.f32 %v541, %v589
        %v606 = vmul.f32 %v542, %v590
        %v607 = vmul.f32 %v543, %v591
        %v608 = vld [vmem:[#allocation2] sm:$0xff]
        %v609 = vld [vmem:[#allocation2 + $0x8] sm:$0xff]
        %v610 = vld [vmem:[#allocation2 + $0x10] sm:$0xff]
        %v611 = vld [vmem:[#allocation2 + $0x18] sm:$0xff]
        %v612 = vld [vmem:[#allocation2 + $0x20] sm:$0xff]
        %v613 = vld [vmem:[#allocation2 + $0x28] sm:$0xff]
        %v614 = vld [vmem:[#allocation2 + $0x30] sm:$0xff]
        %v615 = vld [vmem:[#allocation2 + $0x38] sm:$0xff]
        %v616 = vld [vmem:[#allocation2 + $0x40] sm:$0xff]
        %v617 = vld [vmem:[#allocation2 + $0x48] sm:$0xff]
        %v618 = vld [vmem:[#allocation2 + $0x50] sm:$0xff]
        %v619 = vld [vmem:[#allocation2 + $0x58] sm:$0xff]
        %v620 = vld [vmem:[#allocation2 + $0x60] sm:$0xff]
        %v621 = vld [vmem:[#allocation2 + $0x68] sm:$0xff]
        %v622 = vld [vmem:[#allocation2 + $0x70] sm:$0xff]
        %v623 = vld [vmem:[#allocation2 + $0x78] sm:$0xff]
        %v624 = vld [vmem:[%s288] sm:$0xff]
        %v625 = vld [vmem:[%s288 + $0x8] sm:$0xff]
        %v626 = vld [vmem:[%s288 + $0x10] sm:$0xff]
        %v627 = vld [vmem:[%s288 + $0x18] sm:$0xff]
        %v628 = vld [vmem:[%s288 + $0x20] sm:$0xff]
        %v629 = vld [vmem:[%s288 + $0x28] sm:$0xff]
        %v630 = vld [vmem:[%s288 + $0x30] sm:$0xff]
        %v631 = vld [vmem:[%s288 + $0x38] sm:$0xff]
        %v632 = vld [vmem:[%s288 + $0x40] sm:$0xff]
        %v633 = vld [vmem:[%s288 + $0x48] sm:$0xff]
        %v634 = vld [vmem:[%s288 + $0x50] sm:$0xff]
        %v635 = vld [vmem:[%s288 + $0x58] sm:$0xff]
        %v636 = vld [vmem:[%s288 + $0x60] sm:$0xff]
        %v637 = vld [vmem:[%s288 + $0x68] sm:$0xff]
        %v638 = vld [vmem:[%s288 + $0x70] sm:$0xff]
        %v639 = vld [vmem:[%s288 + $0x78] sm:$0xff]
        %640 = vmatprep.subr.mxu0 0.0
        %641 = vmatpush1.msra.mxu0 %v624
        %642 = vmatprep.subr.mxu0 0.0
        %643 = vmatpush1.msra.mxu0 %v625
        %644 = vmatprep.subr.mxu0 0.0
        %645 = vmatpush1.msra.mxu0 %v626
        %646 = vmatprep.subr.mxu0 0.0
        %647 = vmatpush1.msra.mxu0 %v627
        %648 = vmatprep.subr.mxu0 0.0
        %649 = vmatpush1.msra.mxu0 %v628
        %650 = vmatprep.subr.mxu0 0.0
        %651 = vmatpush1.msra.mxu0 %v629
        %652 = vmatprep.subr.mxu0 0.0
        %653 = vmatpush1.msra.mxu0 %v630
        %654 = vmatprep.subr.mxu0 0.0
        %655 = vmatpush1.msra.mxu0 %v631
        %656 = vmatprep.subr.mxu0 0.0
        %657 = vmatpush1.msra.mxu0 %v632
        %658 = vmatprep.subr.mxu0 0.0
        %659 = vmatpush1.msra.mxu0 %v633
        %660 = vmatprep.subr.mxu0 0.0
        %661 = vmatpush1.msra.mxu0 %v634
        %662 = vmatprep.subr.mxu0 0.0
        %663 = vmatpush1.msra.mxu0 %v635
        %664 = vmatprep.subr.mxu0 0.0
        %665 = vmatpush1.msra.mxu0 %v636
        %666 = vmatprep.subr.mxu0 0.0
        %667 = vmatpush1.msra.mxu0 %v637
        %668 = vmatprep.subr.mxu0 0.0
        %669 = vmatpush1.msra.mxu0 %v638
        %670 = vmatprep.subr.mxu0 0.0
        %671 = vmatpush1.msra.mxu0 %v639
        %672 = vmatprep.subr.mxu0 0.0
        %673 = vmatpush1.msra.mxu0 0.0
        %674 = vmatprep.subr.mxu0 0.0
        %675 = vmatpush1.msra.mxu0 0.0
        %676 = vmatprep.subr.mxu0 0.0
        %677 = vmatpush1.msra.mxu0 0.0
        %678 = vmatprep.subr.mxu0 0.0
        %679 = vmatpush1.msra.mxu0 0.0
        %680 = vmatprep.subr.mxu0 0.0
        %681 = vmatpush1.msra.mxu0 0.0
        %682 = vmatprep.subr.mxu0 0.0
        %683 = vmatpush1.msra.mxu0 0.0
        %684 = vmatprep.subr.mxu0 0.0
        %685 = vmatpush1.msra.mxu0 0.0
        %686 = vmatprep.subr.mxu0 0.0
        %687 = vmatpush1.msra.mxu0 0.0
        %688 = vmatprep.subr.mxu0 0.0
        %689 = vmatpush1.msra.mxu0 0.0
        %690 = vmatprep.subr.mxu0 0.0
        %691 = vmatpush1.msra.mxu0 0.0
        %692 = vmatprep.subr.mxu0 0.0
        %693 = vmatpush1.msra.mxu0 0.0
        %694 = vmatprep.subr.mxu0 0.0
        %695 = vmatpush1.msra.mxu0 0.0
        %696 = vmatprep.subr.mxu0 0.0
        %697 = vmatpush1.msra.mxu0 0.0
        %698 = vmatprep.subr.mxu0 0.0
        %699 = vmatpush1.msra.mxu0 0.0
        %700 = vmatprep.subr.mxu0 0.0
        %701 = vmatpush1.msra.mxu0 0.0
        %702 = vmatprep.subr.mxu0 0.0
        %703 = vmatpush1.msra.mxu0 0.0
        %704 = vmatprep.mubr.f32.mxu0 0.0
        %705 = vmatmul.mubr.f32.gmra.mrb[0].mxu0 %v592
        %v706 = vpop.f32.mrb[0].mxu0
        %v707 = vadd.f32 0.0, %v706
        %v708 = vpop.f32.mrb[0].mxu0
        %709 = vmatprep.mubr.f32.mxu0 0.0
        %710 = vmatmul.mubr.f32.gmra.mrb[0].mxu0 %v593
        %v711 = vpop.f32.mrb[0].mxu0
        %v712 = vadd.f32 0.0, %v711
        %v713 = vpop.f32.mrb[0].mxu0
        %714 = vmatprep.mubr.f32.mxu0 0.0
        %715 = vmatmul.mubr.f32.gmra.mrb[0].mxu0 %v594
        %v716 = vpop.f32.mrb[0].mxu0
        %v717 = vadd.f32 0.0, %v716
        %v718 = vpop.f32.mrb[0].mxu0
        %719 = vmatprep.mubr.f32.mxu0 0.0
        %720 = vmatmul.mubr.f32.gmra.mrb[0].mxu0 %v595
        %v721 = vpop.f32.mrb[0].mxu0
        %v722 = vadd.f32 0.0, %v721
        %v723 = vpop.f32.mrb[0].mxu0
        %724 = vmatprep.mubr.f32.mxu0 0.0
        %725 = vmatmul.mubr.f32.gmra.mrb[0].mxu0 %v596
        %v726 = vpop.f32.mrb[0].mxu0
        %v727 = vadd.f32 0.0, %v726
        %v728 = vpop.f32.mrb[0].mxu0
        %729 = vmatprep.mubr.f32.mxu0 0.0
        %730 = vmatmul.mubr.f32.gmra.mrb[0].mxu0 %v597
        %v731 = vpop.f32.mrb[0].mxu0
        %v732 = vadd.f32 0.0, %v731
        %v733 = vpop.f32.mrb[0].mxu0
        %734 = vmatprep.mubr.f32.mxu0 0.0
        %735 = vmatmul.mubr.f32.gmra.mrb[0].mxu0 %v598
        %v736 = vpop.f32.mrb[0].mxu0
        %v737 = vadd.f32 0.0, %v736
        %v738 = vpop.f32.mrb[0].mxu0
        %739 = vmatprep.mubr.f32.mxu0 0.0
        %740 = vmatmul.mubr.f32.gmra.mrb[0].mxu0 %v599
        %v741 = vpop.f32.mrb[0].mxu0
        %v742 = vadd.f32 0.0, %v741
        %v743 = vpop.f32.mrb[0].mxu0
        %744 = vmatprep.mubr.f32.mxu0 0.0
        %745 = vmatmul.mubr.f32.gmra.mrb[0].mxu0 %v600
        %v746 = vpop.f32.mrb[0].mxu0
        %v747 = vadd.f32 0.0, %v746
        %v748 = vpop.f32.mrb[0].mxu0
        %749 = vmatprep.mubr.f32.mxu0 0.0
        %750 = vmatmul.mubr.f32.gmra.mrb[0].mxu0 %v601
        %v751 = vpop.f32.mrb[0].mxu0
        %v752 = vadd.f32 0.0, %v751
        %v753 = vpop.f32.mrb[0].mxu0
        %754 = vmatprep.mubr.f32.mxu0 0.0
        %755 = vmatmul.mubr.f32.gmra.mrb[0].mxu0 %v602
        %v756 = vpop.f32.mrb[0].mxu0
        %v757 = vadd.f32 0.0, %v756
        %v758 = vpop.f32.mrb[0].mxu0
        %759 = vmatprep.mubr.f32.mxu0 0.0
        %760 = vmatmul.mubr.f32.gmra.mrb[0].mxu0 %v603
        %v761 = vpop.f32.mrb[0].mxu0
        %v762 = vadd.f32 0.0, %v761
        %v763 = vpop.f32.mrb[0].mxu0
        %764 = vmatprep.mubr.f32.mxu0 0.0
        %765 = vmatmul.mubr.f32.gmra.mrb[0].mxu0 %v604
        %v766 = vpop.f32.mrb[0].mxu0
        %v767 = vadd.f32 0.0, %v766
        %v768 = vpop.f32.mrb[0].mxu0
        %769 = vmatprep.mubr.f32.mxu0 0.0
        %770 = vmatmul.mubr.f32.gmra.mrb[0].mxu0 %v605
        %v771 = vpop.f32.mrb[0].mxu0
        %v772 = vadd.f32 0.0, %v771
        %v773 = vpop.f32.mrb[0].mxu0
        %774 = vmatprep.mubr.f32.mxu0 0.0
        %775 = vmatmul.mubr.f32.gmra.mrb[0].mxu0 %v606
        %v776 = vpop.f32.mrb[0].mxu0
        %v777 = vadd.f32 0.0, %v776
        %v778 = vpop.f32.mrb[0].mxu0
        %779 = vmatprep.mubr.f32.mxu0 0.0
        %780 = vmatmul.mubr.f32.gmra.mrb[0].mxu0 %v607
        %v781 = vpop.f32.mrb[0].mxu0
        %v782 = vadd.f32 0.0, %v781
        %v783 = vpop.f32.mrb[0].mxu0
        %784 = vdwg.mxu0
        %v785 = vadd.f32 %v608, %v707
        %v786 = vadd.f32 %v609, %v712
        %v787 = vadd.f32 %v610, %v717
        %v788 = vadd.f32 %v611, %v722
        %v789 = vadd.f32 %v612, %v727
        %v790 = vadd.f32 %v613, %v732
        %v791 = vadd.f32 %v614, %v737
        %v792 = vadd.f32 %v615, %v742
        %v793 = vadd.f32 %v616, %v747
        %v794 = vadd.f32 %v617, %v752
        %v795 = vadd.f32 %v618, %v757
        %v796 = vadd.f32 %v619, %v762
        %v797 = vadd.f32 %v620, %v767
        %v798 = vadd.f32 %v621, %v772
        %v799 = vadd.f32 %v622, %v777
        %v800 = vadd.f32 %v623, %v782
        %801 = vst [vmem:[#allocation2] sm:$0xff] %v785
        %802 = vst [vmem:[#allocation2 + $0x8] sm:$0xff] %v786
        %803 = vst [vmem:[#allocation2 + $0x10] sm:$0xff] %v787
        %804 = vst [vmem:[#allocation2 + $0x18] sm:$0xff] %v788
        %805 = vst [vmem:[#allocation2 + $0x20] sm:$0xff] %v789
        %806 = vst [vmem:[#allocation2 + $0x28] sm:$0xff] %v790
        %807 = vst [vmem:[#allocation2 + $0x30] sm:$0xff] %v791
        %808 = vst [vmem:[#allocation2 + $0x38] sm:$0xff] %v792
        %809 = vst [vmem:[#allocation2 + $0x40] sm:$0xff] %v793
        %810 = vst [vmem:[#allocation2 + $0x48] sm:$0xff] %v794
        %811 = vst [vmem:[#allocation2 + $0x50] sm:$0xff] %v795
        %812 = vst [vmem:[#allocation2 + $0x58] sm:$0xff] %v796
        %813 = vst [vmem:[#allocation2 + $0x60] sm:$0xff] %v797
        %814 = vst [vmem:[#allocation2 + $0x68] sm:$0xff] %v798
        %815 = vst [vmem:[#allocation2 + $0x70] sm:$0xff] %v799
        %816 = vst [vmem:[#allocation2 + $0x78] sm:$0xff] %v800
        %p817 = scmp.eq.s32.totalorder %s26, 1
        // Predicated region
        $region57: #{tpu_custom_call.1} parent=39 // pred_check
          %p818 = pneg %p817
        $region58: #{tpu_custom_call.1} parent=39 // pred_check_branch
          %820 = sbr.rel (%p818) target = $region60
        $region59: #{tpu_custom_call.1} parent=39 // pred_region
          %v821 = vld [vmem:[#allocation2] sm:$0xff]
          %v822 = vld [vmem:[#allocation2 + $0x8] sm:$0xff]
          %v823 = vld [vmem:[#allocation2 + $0x10] sm:$0xff]
          %v824 = vld [vmem:[#allocation2 + $0x18] sm:$0xff]
          %v825 = vld [vmem:[#allocation2 + $0x20] sm:$0xff]
          %v826 = vld [vmem:[#allocation2 + $0x28] sm:$0xff]
          %v827 = vld [vmem:[#allocation2 + $0x30] sm:$0xff]
          %v828 = vld [vmem:[#allocation2 + $0x38] sm:$0xff]
          %v829 = vld [vmem:[#allocation2 + $0x40] sm:$0xff]
          %v830 = vld [vmem:[#allocation2 + $0x48] sm:$0xff]
          %v831 = vld [vmem:[#allocation2 + $0x50] sm:$0xff]
          %v832 = vld [vmem:[#allocation2 + $0x58] sm:$0xff]
          %v833 = vld [vmem:[#allocation2 + $0x60] sm:$0xff]
          %v834 = vld [vmem:[#allocation2 + $0x68] sm:$0xff]
          %v835 = vld [vmem:[#allocation2 + $0x70] sm:$0xff]
          %v836 = vld [vmem:[#allocation2 + $0x78] sm:$0xff]
          %v837 = vld [vmem:[%s4] sm:$0x1]
          %v839 = vlaneseq
          %v840 = vshrl.u32 %v839, 7
          %v841 = vsub.s32 0, %v840
          %v842 = vrot.slane %v837, %v841
          %v844 = vadd.f32 %v821, %v842
          %v845 = vadd.f32 %v822, %v842
          %v846 = vadd.f32 %v823, %v842
          %v847 = vadd.f32 %v824, %v842
          %v848 = vadd.f32 %v825, %v842
          %v849 = vadd.f32 %v826, %v842
          %v850 = vadd.f32 %v827, %v842
          %v851 = vadd.f32 %v828, %v842
          %v852 = vadd.f32 %v829, %v842
          %v853 = vadd.f32 %v830, %v842
          %v854 = vadd.f32 %v831, %v842
          %v855 = vadd.f32 %v832, %v842
          %v856 = vadd.f32 %v833, %v842
          %v857 = vadd.f32 %v834, %v842
          %v858 = vadd.f32 %v835, %v842
          %v859 = vadd.f32 %v836, %v842
          %860 = vst [vmem:[#allocation9] sm:$0xff] %v844
          %861 = vst [vmem:[#allocation9 + $0x8] sm:$0xff] %v845
          %862 = vst [vmem:[#allocation9 + $0x10] sm:$0xff] %v846
          %863 = vst [vmem:[#allocation9 + $0x18] sm:$0xff] %v847
          %864 = vst [vmem:[#allocation9 + $0x20] sm:$0xff] %v848
          %865 = vst [vmem:[#allocation9 + $0x28] sm:$0xff] %v849
          %866 = vst [vmem:[#allocation9 + $0x30] sm:$0xff] %v850
          %867 = vst [vmem:[#allocation9 + $0x38] sm:$0xff] %v851
          %868 = vst [vmem:[#allocation9 + $0x40] sm:$0xff] %v852
          %869 = vst [vmem:[#allocation9 + $0x48] sm:$0xff] %v853
          %870 = vst [vmem:[#allocation9 + $0x50] sm:$0xff] %v854
          %871 = vst [vmem:[#allocation9 + $0x58] sm:$0xff] %v855
          %872 = vst [vmem:[#allocation9 + $0x60] sm:$0xff] %v856
          %873 = vst [vmem:[#allocation9 + $0x68] sm:$0xff] %v857
          %874 = vst [vmem:[#allocation9 + $0x70] sm:$0xff] %v858
          %875 = vst [vmem:[#allocation9 + $0x78] sm:$0xff] %v859
        $region60: #{tpu_custom_call.1} parent=39 // pred_fallthru
          _
        // Predicated region
        $region61: #{tpu_custom_call.1} parent=39 // pred_check
          %p876 = pneg %p176
        $region62: #{tpu_custom_call.1} parent=39 // pred_check_branch
          %878 = sbr.rel (%p876) target = $region64
        $region63: #{tpu_custom_call.1} parent=39 // pred_region
          %s879 = smul.u32 16, %s25
          %s881 = ssub.s32 2048, 2048
          %882 = vsyncadd [#allocation5], %s881
          %s883 = smul.addr %s879, 128
          %s884 = scalar_lea.hbm %s5, %s883
          %s885 = sshll.u32 [#allocation9], 4
          %s886 = int_to_ptr.vmem [resolvable:$true] %s885
          %891 = dma.vmem_to_hbm [thread:$0]  %s886, 2048, %s884, [#allocation5], 128, 128, 8
        $region64: #{tpu_custom_call.1} parent=39 // pred_fallthru
          _
        // Predicated region
        $region65: #{tpu_custom_call.1} parent=39 // pred_check
          %p892 = pneg %p176
        $region66: #{tpu_custom_call.1} parent=39 // pred_check_branch
          %894 = sbr.rel (%p892) target = $region68
        $region67: #{tpu_custom_call.1} parent=39 // pred_region
          %895 = dma.done [#allocation5], 2048
        $region68: #{tpu_custom_call.1} parent=39 // pred_fallthru
          _
      $region40: #{tpu_custom_call.1} parent=5 // pred_fallthru
        _
      %p896 = scmp.le.s32.totalorder 2, %s16
      // Predicated region
      $region69: #{tpu_custom_call.1} parent=5 // pred_check
        %p897 = pneg %p896
      $region70: #{tpu_custom_call.1} parent=5 // pred_check_branch
        %899 = sbr.rel (%p897) target = $region72
      $region71: #{tpu_custom_call.1} parent=5 // pred_region
        %s900 = ssub.s32 %s16, 2
      $region72: #{tpu_custom_call.1} parent=5 // pred_fallthru
        _
    $region6: #{tpu_custom_call.1} parent=1 // loop_footer
      %s20 = sadd.s32 1, %s16
    $region7: #{tpu_custom_call.1} parent=1 // loop_footer_branch
      %15 = sbr.rel target = $region3
    $region8: #{tpu_custom_call.1} parent=1 // loop_exit
      _
    %901 = vsyncpa [#allocation4], 1
    %s902 = scalar_lea.sflag [#allocation4], 1
    %903 = vsyncpa %s902, 1
    %904 = vsyncpa [#allocation7], 1
    %s905 = scalar_lea.sflag [#allocation7], 1
    %906 = vsyncpa %s905, 1
    %907 = vsyncpa [#allocation5], 1
    %s908 = scalar_lea.sflag [#allocation5], 1
    %909 = vsyncpa %s908, 1

</llo_original>
